<compile_context>
chip_gen: v7x
topology: tpu7x:2x2x1
jax: 0.10.0
libtpu: 0.0.40
codegen_flags: <defaults>
</compile_context>

<pallas_src>
import functools

import jax
import jax.numpy as jnp
from jax.experimental import pallas as pl
from jax.experimental.pallas import tpu as pltpu

EPS = 1e-5  # PyTorch GroupNorm default eps


def conv_gn_relu_kernel(cols_ref, w_ref, gamma_ref, beta_ref, o_ref):
    # cols_ref : (1, K, HW)    per-sample im2col columns, K = 9*Cin (compute dtype)
    # w_ref    : (Cout, K)     conv weights                          (compute dtype)
    # gamma_ref: (Cout, 1)     GroupNorm weight                      (f32)
    # beta_ref : (Cout, 1)     GroupNorm bias                        (f32)
    # o_ref    : (1, Cout, HW) per-sample output, flat NCHW
    cols = cols_ref[0]                                     # (K, HW), lane-dense
    # Whole conv for this sample: one MXU matmul, f32 accumulation.
    acc = jnp.dot(w_ref[...], cols,
                  preferred_element_type=jnp.float32)      # (Cout, HW) f32

    cout, hw = acc.shape
    inv_cnt = 1.0 / float(cout * hw)
    # GroupNorm(num_groups=1): one-pass stats over the whole (Cout, HW) sample.
    s = jnp.sum(acc)
    ss = jnp.sum(acc * acc)
    mean = s * inv_cnt
    var = jnp.maximum(ss * inv_cnt - mean * mean, 0.0)     # guard cancellation
    inv_std = jax.lax.rsqrt(var + EPS)                     # EUP rsqrt
    scale = gamma_ref[...] * inv_std                       # (Cout, 1)
    bias = beta_ref[...] - mean * scale                    # (Cout, 1)
    y = jnp.maximum(acc * scale + bias, 0.0)               # FMA + ReLU, f32
    # Dropout2d(dp_rate=0.0) / eval mode == identity.
    o_ref[0] = y.astype(o_ref.dtype)                       # cast only on store


@functools.partial(jax.jit, static_argnames=("p", "compute_dtype", "out_dtype"))
def conv_layer_forward(x_nchw, w_oihw, gamma, beta, *, p=1,
                       compute_dtype=jnp.bfloat16, out_dtype=None):
    """Forward of ConvLayer(inc, outc, k=3, p, norm='ln', dp_rate=0.0)."""
    if out_dtype is None:
        out_dtype = compute_dtype
    N, Cin, H, W = x_nchw.shape
    Cout = w_oihw.shape[0]
    Ho, Wo = H + 2 * p - 2, W + 2 * p - 2        # k=3, stride=1
    HW = Ho * Wo
    K = 9 * Cin

    # ---- im2col in one HLO (fused under jit): identity-kernel grouped conv.
    # Pure data movement (exact in any dtype); channel order c*9 + dy*3 + dx.
    patches = jax.lax.conv_general_dilated_patches(
        x_nchw.astype(compute_dtype), filter_shape=(3, 3),
        window_strides=(1, 1), padding=((p, p), (p, p)),
        dimension_numbers=("NCHW", "OIHW", "NCHW"),
        precision=jax.lax.Precision.HIGHEST)      # (N, K, Ho, Wo)
    cols = patches.reshape(N, K, HW)              # (N, K, HW)

    # OIHW reshape matches the patch K-ordering exactly.
    w_mat = w_oihw.reshape(Cout, K).astype(compute_dtype)
    gamma2 = gamma.reshape(Cout, 1).astype(jnp.float32)
    beta2 = beta.reshape(Cout, 1).astype(jnp.float32)

    out = pl.pallas_call(
        conv_gn_relu_kernel,
        out_shape=jax.ShapeDtypeStruct((N, Cout, HW), out_dtype),
        grid_spec=pltpu.PrefetchScalarGridSpec(
            num_scalar_prefetch=0,
            grid=(N,),                            # per-sample blocks (v7x megacore)
            in_specs=[
                pl.BlockSpec((1, K, HW), lambda n: (n, 0, 0)),
                pl.BlockSpec((Cout, K), lambda n: (0, 0)),
                pl.BlockSpec((Cout, 1), lambda n: (0, 0)),
                pl.BlockSpec((Cout, 1), lambda n: (0, 0)),
            ],
            out_specs=pl.BlockSpec((1, Cout, HW), lambda n: (n, 0, 0)),
        ),
        compiler_params=pltpu.CompilerParams(
            dimension_semantics=("parallel",)),
    )(cols, w_mat, gamma2, beta2)

    # Output is already flat NCHW; reshape is free under jit.
    return out.reshape(N, Cout, Ho, Wo)


@functools.partial(jax.jit, static_argnames=("p", "compute_dtype"))
def reference_forward(x_nchw, w_oihw, gamma, beta, *, p=1,
                      compute_dtype=jnp.float32):
    """Pure-JAX reference (Conv2d -> GroupNorm(1) -> ReLU), f32 accumulation."""
    y = jax.lax.conv_general_dilated(
        x_nchw.astype(compute_dtype), w_oihw.astype(compute_dtype),
        window_strides=(1, 1), padding=[(p, p), (p, p)],
        dimension_numbers=("NCHW", "OIHW", "NCHW"),
        preferred_element_type=jnp.float32)
    mean = y.mean(axis=(1, 2, 3), keepdims=True)
    var = ((y - mean) ** 2).mean(axis=(1, 2, 3), keepdims=True)
    yn = (y - mean) / jnp.sqrt(var + EPS)
    yn = yn * gamma[None, :, None, None] + beta[None, :, None, None]
    return jnp.maximum(yn, 0.0)


if __name__ == "__main__":
    # Small, deterministic instance: batch=2, inc=4, outc=8, spatial=16, p=1.
    N, Cin, Cout, H, W, P = 2, 4, 8, 16, 16, 1

    key = jax.random.PRNGKey(0)
    kx, kw = jax.random.split(key)
    x = jax.random.normal(kx, (N, Cin, H, W), dtype=jnp.float32)
    w = jax.random.normal(kw, (Cout, Cin, 3, 3), dtype=jnp.float32) * 0.1
    # Non-trivial GroupNorm affine params (PyTorch defaults would be 1 / 0).
    gamma = jnp.linspace(0.5, 1.5, Cout, dtype=jnp.float32)
    beta = jnp.linspace(-0.2, 0.3, Cout, dtype=jnp.float32)

    # 1) f32 semantics check (validation-only path; matches the f32 PyTorch module).
    out_f32 = jax.block_until_ready(
        conv_layer_forward(x, w, gamma, beta, p=P,
                           compute_dtype=jnp.float32, out_dtype=jnp.float32))
    ref_f32 = jax.block_until_ready(
        reference_forward(x, w, gamma, beta, p=P, compute_dtype=jnp.float32))
    assert out_f32.shape == (N, Cout, H, W)
    assert jnp.allclose(out_f32, ref_f32, atol=1e-4, rtol=1e-4), "f32 mismatch"

    # 2) Production path (default): bf16 operands / f32 accumulation, bf16 output.
    #    Documented contract: validated against a precision-matched bf16
    #    reference; it will not bit-match an f32 PyTorch module.
    out_bf16 = jax.block_until_ready(
        conv_layer_forward(x, w, gamma, beta, p=P, compute_dtype=jnp.bfloat16))
    assert out_bf16.dtype == jnp.bfloat16
    ref_bf16 = jax.block_until_ready(
        reference_forward(x, w, gamma, beta, p=P, compute_dtype=jnp.bfloat16))
    assert jnp.allclose(out_bf16.astype(jnp.float32), ref_bf16,
                        atol=2e-2, rtol=2e-2), "bf16 mismatch"

    # TODO(synk): Dropout2d is modeled as identity (dp_rate=0.0 / eval mode);
    # training-mode channel dropout would need pltpu.prng_seed/prng_random_bits.
    # TODO(synk): only the norm='ln' (GroupNorm(num_groups=1)) variant is
    # implemented; 'bn'/'gn' need different statistics plumbing.
    print("KERNEL_OK")
</pallas_src>

<mosaic_0001>
module attributes {stable_mosaic.version = 11 : i64} {
  func.func @conv_gn_relu_kernel(%arg0: i32, %arg1: memref<1x36x256xf32, #tpu.memory_space<vmem>>, %arg2: memref<8x36xf32, #tpu.memory_space<vmem>>, %arg3: memref<8x1xf32, #tpu.memory_space<vmem>>, %arg4: memref<8x1xf32, #tpu.memory_space<vmem>>, %arg5: memref<1x8x256xf32, #tpu.memory_space<vmem>>) attributes {dimension_semantics = [#tpu.dimension_semantics<parallel>], iteration_bounds = array<i64: 2>, scalar_prefetch = 0 : i64, scratch_operands = 0 : i64, tpu.core_type = #tpu.core_type<tc>, window_params = [{transform_indices = @transform_0, window_bounds = array<i64: 1, 36, 256>}, {pipeline_mode = #tpu.pipeline_mode<synchronous>, transform_indices = @transform_1, window_bounds = array<i64: 8, 36>}, {pipeline_mode = #tpu.pipeline_mode<synchronous>, transform_indices = @transform_2, window_bounds = array<i64: 8, 1>}, {pipeline_mode = #tpu.pipeline_mode<synchronous>, transform_indices = @transform_3, window_bounds = array<i64: 8, 1>}, {transform_indices = @transform_4, window_bounds = array<i64: 1, 8, 256>}]} {
    %c0 = arith.constant 0 : index
    %c0_0 = arith.constant 0 : index
    %c0_1 = arith.constant 0 : index
    %0 = vector.load %arg1[%c0, %c0_0, %c0_1] : memref<1x36x256xf32, #tpu.memory_space<vmem>>, vector<1x36x256xf32>
    %1 = vector.shape_cast %0 : vector<1x36x256xf32> to vector<36x256xf32>
    %c0_2 = arith.constant 0 : index
    %c0_3 = arith.constant 0 : index
    %2 = vector.load %arg2[%c0_2, %c0_3] : memref<8x36xf32, #tpu.memory_space<vmem>>, vector<8x36xf32>
    %cst = arith.constant dense<0.000000e+00> : vector<8x256xf32>
    %3 = tpu.matmul %2, %1, %cst {dimension_numbers = #tpu.dot_dimension_numbers<[1], [0], [0], [1], [0, 0, 1, 1], [], []>} : vector<8x36xf32>, vector<36x256xf32>, vector<8x256xf32> -> vector<8x256xf32>
    %4 = vector.shape_cast %3 : vector<8x256xf32> to vector<1x8x256xf32>
    %cst_4 = arith.constant dense<0.000000e+00> : vector<1xf32>
    %5 = vector.multi_reduction <add>, %4, %cst_4 [1, 2] : vector<1x8x256xf32> to vector<1xf32>
    %6 = vector.shape_cast %5 : vector<1xf32> to vector<1x1x1xf32>
    %7 = vector.extract %6[0, 0, 0] : f32 from vector<1x1x1xf32>
    %8 = arith.mulf %3, %3 : vector<8x256xf32>
    %9 = vector.shape_cast %8 : vector<8x256xf32> to vector<1x8x256xf32>
    %cst_5 = arith.constant dense<0.000000e+00> : vector<1xf32>
    %10 = vector.multi_reduction <add>, %9, %cst_5 [1, 2] : vector<1x8x256xf32> to vector<1xf32>
    %11 = vector.shape_cast %10 : vector<1xf32> to vector<1x1x1xf32>
    %12 = vector.extract %11[0, 0, 0] : f32 from vector<1x1x1xf32>
    %cst_6 = arith.constant 4.8828125E-4 : f32
    %13 = arith.mulf %7, %cst_6 : f32
    %cst_7 = arith.constant 4.8828125E-4 : f32
    %14 = arith.mulf %12, %cst_7 : f32
    %15 = arith.mulf %13, %13 : f32
    %16 = arith.subf %14, %15 : f32
    %cst_8 = arith.constant 0.000000e+00 : f32
    %17 = arith.maximumf %16, %cst_8 : f32
    %cst_9 = arith.constant 9.99999974E-6 : f32
    %18 = arith.addf %17, %cst_9 : f32
    %19 = math.rsqrt %18 : f32
    %c0_10 = arith.constant 0 : index
    %c0_11 = arith.constant 0 : index
    %20 = vector.load %arg3[%c0_10, %c0_11] : memref<8x1xf32, #tpu.memory_space<vmem>>, vector<8x1xf32>
    %21 = vector.broadcast %19 : f32 to vector<8x1xf32>
    %22 = arith.mulf %20, %21 : vector<8x1xf32>
    %c0_12 = arith.constant 0 : index
    %c0_13 = arith.constant 0 : index
    %23 = vector.load %arg4[%c0_12, %c0_13] : memref<8x1xf32, #tpu.memory_space<vmem>>, vector<8x1xf32>
    %24 = vector.broadcast %13 : f32 to vector<8x1xf32>
    %25 = arith.mulf %24, %22 : vector<8x1xf32>
    %26 = arith.subf %23, %25 : vector<8x1xf32>
    %27 = vector.broadcast %22 : vector<8x1xf32> to vector<8x256xf32>
    %28 = arith.mulf %3, %27 : vector<8x256xf32>
    %29 = vector.broadcast %26 : vector<8x1xf32> to vector<8x256xf32>
    %30 = arith.addf %28, %29 : vector<8x256xf32>
    %cst_14 = arith.constant 0.000000e+00 : f32
    %31 = vector.broadcast %cst_14 : f32 to vector<8x256xf32>
    %32 = arith.maximumf %30, %31 : vector<8x256xf32>
    %c0_15 = arith.constant 0 : index
    %c0_16 = arith.constant 0 : index
    %c0_17 = arith.constant 0 : index
    %33 = vector.load %arg5[%c0_15, %c0_16, %c0_17] : memref<1x8x256xf32, #tpu.memory_space<vmem>>, vector<1x8x256xf32>
    %34 = vector.shape_cast %33 : vector<1x8x256xf32> to vector<8x256xf32>
    %35 = vector.shape_cast %32 : vector<8x256xf32> to vector<1x8x256xf32>
    tpu.vector_store %arg5[%c0_15, %c0_16, %c0_17], %35 {strides = array<i32>} : memref<1x8x256xf32, #tpu.memory_space<vmem>>, vector<1x8x256xf32>,
    return
  }
  func.func @transform_0(%arg0: i32) -> (i32, i32, i32) {
    %c0_i32 = arith.constant 0 : i32
    %c0_i32_0 = arith.constant 0 : i32
    %c0_i32_1 = arith.constant 0 : i32
    return %arg0, %c0_i32, %c0_i32_0 : i32, i32, i32
  }
  func.func @transform_1(%arg0: i32) -> (i32, i32) {
    %c0_i32 = arith.constant 0 : i32
    %c0_i32_0 = arith.constant 0 : i32
    %c0_i32_1 = arith.constant 0 : i32
    return %c0_i32, %c0_i32_0 : i32, i32
  }
  func.func @transform_2(%arg0: i32) -> (i32, i32) {
    %c0_i32 = arith.constant 0 : i32
    %c0_i32_0 = arith.constant 0 : i32
    %c0_i32_1 = arith.constant 0 : i32
    return %c0_i32, %c0_i32_0 : i32, i32
  }
  func.func @transform_3(%arg0: i32) -> (i32, i32) {
    %c0_i32 = arith.constant 0 : i32
    %c0_i32_0 = arith.constant 0 : i32
    %c0_i32_1 = arith.constant 0 : i32
    return %c0_i32, %c0_i32_0 : i32, i32
  }
  func.func @transform_4(%arg0: i32) -> (i32, i32, i32) {
    %c0_i32 = arith.constant 0 : i32
    %c0_i32_0 = arith.constant 0 : i32
    %c0_i32_1 = arith.constant 0 : i32
    return %arg0, %c0_i32, %c0_i32_0 : i32, i32, i32
  }
}

</mosaic_0001>

<llo_original>
// kernel: conv_layer_forward.1
$region0: #{conv_layer_forward.1}
  #allocation0 [shape = 'u32[]', space=smem, size = 0x4, offset = 0x4, fixed_abs, tag = 'smem constant byte address 0x4 - core index']
  #allocation1 [shape = 'u32[144,128]{1,0:T(1,128)}', space=vmem, size = 0x12000, scoped, tag = 'internal scratch']
  %s0 = inlined_call_operand.vmem [shape: f32[2,36,256], index: 0, kind: input, shape index: {}]
  %s1 = inlined_call_operand.vmem [shape: f32[8,36], index: 1, kind: input, shape index: {}]
  %s2 = inlined_call_operand.vmem [shape: f32[8,1], index: 2, kind: input, shape index: {}]
  %s3 = inlined_call_operand.vmem [shape: f32[8,1], index: 3, kind: input, shape index: {}]
  %s4 = inlined_call_operand.vmem [shape: f32[2,8,256], index: 4, kind: output, shape index: {}]
  %s5 = sld [smem:[#allocation0]]
  $region49: #{conv_layer_forward.1} parent=0
    _
  %s7 = ssub.s32 1, %s5
  %s8 = scalar_select 0, %s7, %s5
  loop: start=0, step=1, limit=4
  $region2: #{conv_layer_forward.1} parent=0 // loop_pre_header
    _
  $region3: #{conv_layer_forward.1} parent=0 // loop_header
    %s10 = sphi 0, %s14
    %p11 = scmp.ge.s32.totalorder %s10, 4
    %s20 = sphi 0, %s22
    %s23 = sphi 0, %s20
    %s24 = sphi 0, %s23
    %s40 = sphi 0, %s24
    %s44 = sphi 0, %s44
    %s46 = sphi 0, %s44
    %s47 = sphi 0, %s46
    %s61 = sphi 0, %s47
    %s65 = sphi 0, %s65
    %s67 = sphi 0, %s65
    %s68 = sphi 0, %s67
    %s82 = sphi 0, %s68
    %s86 = sphi 0, %s86
    %s88 = sphi 0, %s86
    %s89 = sphi 0, %s88
    %s103 = sphi 0, %s89
    %s109 = sphi 0, %s111
    %s112 = sphi 0, %s109
    %s113 = sphi 0, %s112
    %s129 = sphi 0, %s113
  $region4: #{conv_layer_forward.1} parent=0 // loop_header_branch
    %13 = sbr.rel (%p11) target = $region8
  $region5: #{conv_layer_forward.1} parent=0 // loop_body
    %s15 = ssub.s32 %s10, 1
    %s16 = ssub.s32 %s10, 2
    %s17 = sadd.s32 %s10, 1
    %s18 = ssub.s32 %s10, %s17
    %p19 = scmp.eq.s32.totalorder %s18, 0
    %s21 = sadd.s32 %s20, 1
    %s22 = scalar_select %p19, %s20, %s21
    %p25 = pneg %p19
    %p26 = scmp.eq.s32.totalorder %s10, 1
    %p27 = por %p25, %p26
    %p28 = scmp.ne.s32.totalorder %s20, %s23
    %p29 = scmp.eq.s32.totalorder %s10, 0
    %p30 = por %p28, %p29
    %p31 = scmp.ne.s32.totalorder %s20, %s23
    %p32 = scmp.eq.s32.totalorder %s15, 1
    %p33 = por %p31, %p32
    %p34 = scmp.ne.s32.totalorder %s23, %s24
    %p35 = scmp.eq.s32.totalorder %s15, 0
    %p36 = por %p34, %p35
    %p37 = scmp.ne.s32.totalorder %s23, %s24
    %p38 = scmp.eq.s32.totalorder %s16, 1
    %p39 = por %p37, %p38
    %p41 = scmp.ne.s32.totalorder %s24, %s40
    %p42 = scmp.eq.s32.totalorder %s16, 0
    %p43 = por %p41, %p42
    %s45 = sadd.s32 %s44, 1
    %p48 = scmp.eq.s32.totalorder %s10, 1
    %p49 = scmp.ne.s32.totalorder %s44, %s46
    %p50 = scmp.eq.s32.totalorder %s10, 0
    %p51 = por %p49, %p50
    %p52 = scmp.ne.s32.totalorder %s44, %s46
    %p53 = scmp.eq.s32.totalorder %s15, 1
    %p54 = por %p52, %p53
    %p55 = scmp.ne.s32.totalorder %s46, %s47
    %p56 = scmp.eq.s32.totalorder %s15, 0
    %p57 = por %p55, %p56
    %p58 = scmp.ne.s32.totalorder %s46, %s47
    %p59 = scmp.eq.s32.totalorder %s16, 1
    %p60 = por %p58, %p59
    %p62 = scmp.ne.s32.totalorder %s47, %s61
    %p63 = scmp.eq.s32.totalorder %s16, 0
    %p64 = por %p62, %p63
    %s66 = sadd.s32 %s65, 1
    %p69 = scmp.eq.s32.totalorder %s10, 1
    %p70 = scmp.ne.s32.totalorder %s65, %s67
    %p71 = scmp.eq.s32.totalorder %s10, 0
    %p72 = por %p70, %p71
    %p73 = scmp.ne.s32.totalorder %s65, %s67
    %p74 = scmp.eq.s32.totalorder %s15, 1
    %p75 = por %p73, %p74
    %p76 = scmp.ne.s32.totalorder %s67, %s68
    %p77 = scmp.eq.s32.totalorder %s15, 0
    %p78 = por %p76, %p77
    %p79 = scmp.ne.s32.totalorder %s67, %s68
    %p80 = scmp.eq.s32.totalorder %s16, 1
    %p81 = por %p79, %p80
    %p83 = scmp.ne.s32.totalorder %s68, %s82
    %p84 = scmp.eq.s32.totalorder %s16, 0
    %p85 = por %p83, %p84
    %s87 = sadd.s32 %s86, 1
    %p90 = scmp.eq.s32.totalorder %s10, 1
    %p91 = scmp.ne.s32.totalorder %s86, %s88
    %p92 = scmp.eq.s32.totalorder %s10, 0
    %p93 = por %p91, %p92
    %p94 = scmp.ne.s32.totalorder %s86, %s88
    %p95 = scmp.eq.s32.totalorder %s15, 1
    %p96 = por %p94, %p95
    %p97 = scmp.ne.s32.totalorder %s88, %s89
    %p98 = scmp.eq.s32.totalorder %s15, 0
    %p99 = por %p97, %p98
    %p100 = scmp.ne.s32.totalorder %s88, %s89
    %p101 = scmp.eq.s32.totalorder %s16, 1
    %p102 = por %p100, %p101
    %p104 = scmp.ne.s32.totalorder %s89, %s103
    %p105 = scmp.eq.s32.totalorder %s16, 0
    %p106 = por %p104, %p105
    %s107 = ssub.s32 %s10, %s17
    %p108 = scmp.eq.s32.totalorder %s107, 0
    %s110 = sadd.s32 %s109, 1
    %s111 = scalar_select %p108, %s109, %s110
    %p114 = pneg %p108
    %p115 = scmp.eq.s32.totalorder %s10, 1
    %p116 = por %p114, %p115
    %p117 = scmp.ne.s32.totalorder %s109, %s112
    %p118 = scmp.eq.s32.totalorder %s10, 0
    %p119 = por %p117, %p118
    %p120 = scmp.ne.s32.totalorder %s109, %s112
    %p121 = scmp.eq.s32.totalorder %s15, 1
    %p122 = por %p120, %p121
    %p123 = scmp.ne.s32.totalorder %s112, %s113
    %p124 = scmp.eq.s32.totalorder %s15, 0
    %p125 = por %p123, %p124
    %p126 = scmp.ne.s32.totalorder %s112, %s113
    %p127 = scmp.eq.s32.totalorder %s16, 1
    %p128 = por %p126, %p127
    %p130 = scmp.ne.s32.totalorder %s113, %s129
    %p131 = scmp.eq.s32.totalorder %s16, 0
    %p132 = por %p130, %p131
    %p133 = scmp.le.s32.totalorder 1, %s10
    %p134 = scmp.lt.s32.totalorder %s10, 3
    %p135 = pnand %p133, %p134
    %p136 = pneg %p135
    // Predicated region
    $region9: #{conv_layer_forward.1} parent=5 // pred_check
      _
    $region10: #{conv_layer_forward.1} parent=5 // pred_check_branch
      %138 = sbr.rel (%p135) target = $region12
    $region11: #{conv_layer_forward.1} parent=5 // pred_region
      %s139 = ssub.s32 %s10, 1
      // Predicated region
      $region13: #{conv_layer_forward.1} parent=11 // pred_check
        %p140 = pneg %p57
      $region14: #{conv_layer_forward.1} parent=11 // pred_check_branch
        %142 = sbr.rel (%p140) target = $region16
      $region15: #{conv_layer_forward.1} parent=11 // pred_region
        _
      $region16: #{conv_layer_forward.1} parent=11 // pred_fallthru
        _
      // Predicated region
      $region17: #{conv_layer_forward.1} parent=11 // pred_check
        %p143 = pneg %p78
      $region18: #{conv_layer_forward.1} parent=11 // pred_check_branch
        %145 = sbr.rel (%p143) target = $region20
      $region19: #{conv_layer_forward.1} parent=11 // pred_region
        _
      $region20: #{conv_layer_forward.1} parent=11 // pred_fallthru
        _
      // Predicated region
      $region21: #{conv_layer_forward.1} parent=11 // pred_check
        %p146 = pneg %p99
      $region22: #{conv_layer_forward.1} parent=11 // pred_check_branch
        %148 = sbr.rel (%p146) target = $region24
      $region23: #{conv_layer_forward.1} parent=11 // pred_region
        _
      $region24: #{conv_layer_forward.1} parent=11 // pred_fallthru
        _
    $region12: #{conv_layer_forward.1} parent=5 // pred_fallthru
      _
    %p149 = scmp.lt.s32.totalorder %s10, 2
    // Predicated region
    $region25: #{conv_layer_forward.1} parent=5 // pred_check
      %p150 = pneg %p149
    $region26: #{conv_layer_forward.1} parent=5 // pred_check_branch
      %152 = sbr.rel (%p150) target = $region28
    $region27: #{conv_layer_forward.1} parent=5 // pred_region
      // Predicated region
      $region29: #{conv_layer_forward.1} parent=27 // pred_check
        %p153 = pneg %p30
      $region30: #{conv_layer_forward.1} parent=27 // pred_check_branch
        %155 = sbr.rel (%p153) target = $region32
      $region31: #{conv_layer_forward.1} parent=27 // pred_region
        %p156 = scmp.lt.s32.totalorder %s10, 1
        %s157 = scalar_select %p156, %s10, 1
        %s158 = smul.addr %s157, 10
        %s159 = smul.addr %s158, 8
        %s160 = scalar_lea.vmem %s0, %s159
      $region32: #{conv_layer_forward.1} parent=27 // pred_fallthru
        _
    $region28: #{conv_layer_forward.1} parent=5 // pred_fallthru
      _
    %p161 = scmp.le.s32.totalorder 1, %s10
    %p162 = scmp.lt.s32.totalorder %s10, 3
    %p163 = pnand %p161, %p162
    %p164 = pneg %p163
    // Predicated region
    $region33: #{conv_layer_forward.1} parent=5 // pred_check
      _
    $region34: #{conv_layer_forward.1} parent=5 // pred_check_branch
      %166 = sbr.rel (%p163) target = $region36
    $region35: #{conv_layer_forward.1} parent=5 // pred_region
      %s167 = ssub.s32 %s10, 1
      %p168 = scmp.lt.s32.totalorder %s15, 1
      %s169 = scalar_select %p168, %s15, 1
      %s170 = smul.addr %s169, 10
      %s171 = smul.addr %s170, 8
      %s172 = scalar_lea.vmem %s0, %s171
      %p173 = pneg %p36
      %p174 = pneg %p33
      %p175 = pneg %p57
      %p176 = pneg %p54
      %p177 = pneg %p78
      %p178 = pneg %p75
      %p179 = pneg %p99
      %p180 = pneg %p96
      %p181 = pneg %p125
      %p182 = pneg %p122
      %p183 = scmp.lt.s32.totalorder %s15, 1
      %s184 = scalar_select %p183, %s15, 1
      %s185 = smul.addr %s184, 2
      %s186 = smul.addr %s185, 8
      %s187 = scalar_lea.vmem %s4, %s186
      %p188 = scmp.lt.s32.totalorder %s15, 1
      %s189 = scalar_select %p188, %s15, 1
      %s190 = smul.addr %s189, 10
      %s191 = smul.addr %s190, 8
      %s192 = scalar_lea.vmem %s0, %s191
      %p193 = scmp.lt.s32.totalorder %s15, 1
      %s194 = scalar_select %p193, %s15, 1
      %s195 = smul.addr %s194, 2
      %s196 = smul.addr %s195, 8
      %s197 = scalar_lea.vmem %s4, %s196
      %v198 = vld [vmem:[%s192] sm:$0xff]
      %v199 = vld [vmem:[%s192 + $0x8] sm:$0xff]
      %v200 = vld [vmem:[%s192 + $0x10] sm:$0xff]
      %v201 = vld [vmem:[%s192 + $0x18] sm:$0xff]
      %v202 = vld [vmem:[%s192 + $0x20] sm:$0xff]
      %v203 = vld [vmem:[%s192 + $0x28] sm:$0xff]
      %v204 = vld [vmem:[%s192 + $0x30] sm:$0xff]
      %v205 = vld [vmem:[%s192 + $0x38] sm:$0xff]
      %v206 = vld [vmem:[%s192 + $0x40] sm:$0xf]
      %v207 = vld [vmem:[%s192 + $0x48] sm:$0xf]
      %v208 = vld [vmem:[%s1] sm:$0xff]
      %vm209 = vcmask 293888
      %v211 = vsel %vm209, %v208, 0
      %vm213 = vcmask 1043456
      %v215 = vsel %vm213, %v206, 0
      %v218 = vsel %vm213, %v207, 0
      %220 = vmatprep.subr.mxu0 %v199
      %221 = vmatpush1.msra.mxu0 %v198
      %222 = vmatprep.subr.mxu0 %v201
      %223 = vmatpush1.msra.mxu0 %v200
      %224 = vmatprep.subr.mxu0 %v203
      %225 = vmatpush1.msra.mxu0 %v202
      %226 = vmatprep.subr.mxu0 %v205
      %227 = vmatpush1.msra.mxu0 %v204
      %228 = vmatprep.subr.mxu0 %v218
      %229 = vmatpush1.msra.mxu0 %v215
      %230 = vmatprep.subr.mxu0 0.0
      %231 = vmatpush1.msra.mxu0 0.0
      %232 = vmatprep.subr.mxu0 0.0
      %233 = vmatpush1.msra.mxu0 0.0
      %234 = vmatprep.subr.mxu0 0.0
      %235 = vmatpush1.msra.mxu0 0.0
      %236 = vmatprep.subr.mxu0 0.0
      %237 = vmatpush1.msra.mxu0 0.0
      %238 = vmatprep.subr.mxu0 0.0
      %239 = vmatpush1.msra.mxu0 0.0
      %240 = vmatprep.subr.mxu0 0.0
      %241 = vmatpush1.msra.mxu0 0.0
      %242 = vmatprep.subr.mxu0 0.0
      %243 = vmatpush1.msra.mxu0 0.0
      %244 = vmatprep.subr.mxu0 0.0
      %245 = vmatpush1.msra.mxu0 0.0
      %246 = vmatprep.subr.mxu0 0.0
      %247 = vmatpush1.msra.mxu0 0.0
      %248 = vmatprep.subr.mxu0 0.0
      %249 = vmatpush1.msra.mxu0 0.0
      %250 = vmatprep.subr.mxu0 0.0
      %251 = vmatpush1.msra.mxu0 0.0
      %252 = vmatprep.subr.mxu0 0.0
      %253 = vmatpush1.msra.mxu0 0.0
      %254 = vmatprep.subr.mxu0 0.0
      %255 = vmatpush1.msra.mxu0 0.0
      %256 = vmatprep.subr.mxu0 0.0
      %257 = vmatpush1.msra.mxu0 0.0
      %258 = vmatprep.subr.mxu0 0.0
      %259 = vmatpush1.msra.mxu0 0.0
      %260 = vmatprep.subr.mxu0 0.0
      %261 = vmatpush1.msra.mxu0 0.0
      %262 = vmatprep.subr.mxu0 0.0
      %263 = vmatpush1.msra.mxu0 0.0
      %264 = vmatprep.subr.mxu0 0.0
      %265 = vmatpush1.msra.mxu0 0.0
      %266 = vmatprep.subr.mxu0 0.0
      %267 = vmatpush1.msra.mxu0 0.0
      %268 = vmatprep.subr.mxu0 0.0
      %269 = vmatpush1.msra.mxu0 0.0
      %270 = vmatprep.subr.mxu0 0.0
      %271 = vmatpush1.msra.mxu0 0.0
      %272 = vmatprep.subr.mxu0 0.0
      %273 = vmatpush1.msra.mxu0 0.0
      %274 = vmatprep.subr.mxu0 0.0
      %275 = vmatpush1.msra.mxu0 0.0
      %276 = vmatprep.subr.mxu0 0.0
      %277 = vmatpush1.msra.mxu0 0.0
      %278 = vmatprep.subr.mxu0 0.0
      %279 = vmatpush1.msra.mxu0 0.0
      %280 = vmatprep.subr.mxu0 0.0
      %281 = vmatpush1.msra.mxu0 0.0
      %282 = vmatprep.subr.mxu0 0.0
      %283 = vmatpush1.msra.mxu0 0.0
      %284 = vmatprep.mubr.f32.mxu0 0.0
      %285 = vmatmul.mubr.f32.gmra.mrb[0].mxu0 %v211
      %v286 = vpop.f32.mrb[0].mxu0
      %v287 = vadd.f32 0.0, %v286
      %v288 = vpop.f32.mrb[0].mxu0
      %v289 = vadd.f32 0.0, %v288
      %290 = vdwg.mxu0
      %v291 = vadd.f32 %v287, %v289
      %292 = vadd.xlane.f32.xlu0 %v291
      %v293 = vpop.xlane.xlu0 %292
      %v294 = vrot.slane %v293, 4
      %v295 = vadd.f32 %v293, %v294
      %v296 = vrot.slane %v295, 2
      %v297 = vadd.f32 %v295, %v296
      %v298 = vrot.slane %v297, 1
      %v299 = vadd.f32 %v297, %v298
      %s300 = vtos %v299
      %v301 = vmul.f32 %v287, %v287
      %v302 = vmul.f32 %v289, %v289
      %v303 = vadd.f32 %v301, %v302
      %304 = vadd.xlane.f32.xlu0 %v303
      %v305 = vpop.xlane.xlu0 %304
      %v306 = vrot.slane %v305, 4
      %v307 = vadd.f32 %v305, %v306
      %v308 = vrot.slane %v307, 2
      %v309 = vadd.f32 %v307, %v308
      %v310 = vrot.slane %v309, 1
      %v311 = vadd.f32 %v309, %v310
      %s312 = vtos %v311
      %s313 = smul.f32 %s300, 0.00048828125
      %s314 = smul.f32 %s312, 0.00048828125
      %s315 = smul.f32 %s313, %s313
      %s316 = ssub.f32 %s314, %s315
      %s317 = smax.f32 %s316, 0.0
      %s318 = sadd.f32 %s317, 1e-05
      %v319 = vstv %s318
      %v320 = vrsqrt.pop %v319
      %s321 = vtos %v320
      %v322 = vld [vmem:[%s2] sm:$0xff]
      %v323 = vstv %s321
      %v324 = vmul.f32 %v322, %v323
      %v325 = vld [vmem:[%s3] sm:$0xff]
      %v326 = vstv %s313
      %v327 = vmul.f32 %v326, %v324
      %v328 = vsub.f32 %v325, %v327
      %330 = vset.pattern.permute.xlu0 0
      %331 = vperm.xlu0 %330, %v324
      %v332 = vpop.permute.xlu0 %331
      %v334 = vmul.f32 %v287, %v332
      %v335 = vmul.f32 %v289, %v332
      %337 = vset.pattern.permute.xlu0 0
      %338 = vperm.xlu0 %337, %v328
      %v339 = vpop.permute.xlu0 %338
      %v341 = vadd.f32 %v334, %v339
      %v342 = vadd.f32 %v335, %v339
      %v343 = vmax.f32 %v341, 0.0
      %v344 = vmax.f32 %v342, 0.0
      %345 = vst [vmem:[%s197] sm:$0xff] %v343
      %346 = vst [vmem:[%s197 + $0x8] sm:$0xff] %v344
      %p347 = scmp.lt.s32.totalorder %s15, 1
      %s348 = scalar_select %p347, %s15, 1
      %s349 = smul.addr %s348, 2
      %s350 = smul.addr %s349, 8
      %s351 = scalar_lea.vmem %s4, %s350
      // Predicated region
      $region37: #{conv_layer_forward.1} parent=35 // pred_check
        %p352 = pneg %p122
      $region38: #{conv_layer_forward.1} parent=35 // pred_check_branch
        %354 = sbr.rel (%p352) target = $region40
      $region39: #{conv_layer_forward.1} parent=35 // pred_region
        _
      $region40: #{conv_layer_forward.1} parent=35 // pred_fallthru
        _
    $region36: #{conv_layer_forward.1} parent=5 // pred_fallthru
      _
    %p355 = scmp.le.s32.totalorder 2, %s10
    // Predicated region
    $region41: #{conv_layer_forward.1} parent=5 // pred_check
      %p356 = pneg %p355
    $region42: #{conv_layer_forward.1} parent=5 // pred_check_branch
      %358 = sbr.rel (%p356) target = $region44
    $region43: #{conv_layer_forward.1} parent=5 // pred_region
      %s359 = ssub.s32 %s10, 2
      // Predicated region
      $region45: #{conv_layer_forward.1} parent=43 // pred_check
        %p360 = pneg %p128
      $region46: #{conv_layer_forward.1} parent=43 // pred_check_branch
        %362 = sbr.rel (%p360) target = $region48
      $region47: #{conv_layer_forward.1} parent=43 // pred_region
        %p363 = scmp.lt.s32.totalorder %s16, 1
        %s364 = scalar_select %p363, %s16, 1
        %s365 = smul.addr %s364, 2
        %s366 = smul.addr %s365, 8
        %s367 = scalar_lea.vmem %s4, %s366
      $region48: #{conv_layer_forward.1} parent=43 // pred_fallthru
        _
    $region44: #{conv_layer_forward.1} parent=5 // pred_fallthru
      _
  $region6: #{conv_layer_forward.1} parent=0 // loop_footer
    %s14 = sadd.s32 1, %s10
  $region7: #{conv_layer_forward.1} parent=0 // loop_footer_branch
    %9 = sbr.rel target = $region3
  $region8: #{conv_layer_forward.1} parent=0 // loop_exit
    _

</llo_original>
